<compile_context>
chip_gen: v7x
topology: tpu7x:2x2x1
jax: 0.10.0
libtpu: 0.0.40
codegen_flags: <defaults>
</compile_context>

<pallas_src>
import functools

import numpy as np
import jax
import jax.numpy as jnp
from jax.experimental import pallas as pl
from jax.experimental.pallas import tpu as pltpu


# ----------------------------------------------------------------------------
# Helpers
# ----------------------------------------------------------------------------
def _round_up(x, m):
    return (x + m - 1) // m * m


_TM_CAP = 256          # M tile cap (activations are small; full block if M<=cap)
_TN_CAP = 1024         # N tile cap: keeps double-buffered weight blocks small
                       # enough for v7x's 32 MiB scoped / 64 MiB physical VMEM
_VMEM_LIMIT = 48 * 1024 * 1024   # explicit scoped-VMEM cap, safe on v5e/v6e/v7x


# ----------------------------------------------------------------------------
# Pallas kernels
# ----------------------------------------------------------------------------
def _matmul_bn_kernel(a_ref, b_ref, t_ref, o_ref, *, relu):
    """out = (a @ b) + shift (+ optional ReLU). bf16 operands, f32 accumulate."""
    acc = jnp.dot(a_ref[...], b_ref[...], preferred_element_type=jnp.float32)
    out = acc + t_ref[...]
    if relu:
        out = jnp.maximum(out, 0.0)
    o_ref[...] = out.astype(o_ref.dtype)


def _matmul_bn_res_kernel(a_ref, b_ref, t_ref, id_ref, o_ref, *, relu):
    """out = [relu]((a @ b) + shift + identity). Residual fused in epilogue."""
    acc = jnp.dot(a_ref[...], b_ref[...], preferred_element_type=jnp.float32)
    out = acc + t_ref[...] + id_ref[...].astype(jnp.float32)
    if relu:
        out = jnp.maximum(out, 0.0)
    o_ref[...] = out.astype(o_ref.dtype)


def _conv3x3_taps_kernel(x_ref, w_ref, t_ref, o_ref, *, offsets, cin, relu):
    """Stride-1 3x3 conv as 9 row-shifted sub-matmuls of one VMEM-resident
    flattened padded image. x_ref: (1, Lp, Cin); w_ref: (9*Cin, tn);
    t_ref: (1, tn); o_ref: (1, R, tn). Accumulation in f32."""
    rows = o_ref.shape[1]
    acc = None
    for t, off in enumerate(offsets):                 # static 9-iteration loop
        a = x_ref[0, off:off + rows, :]               # shifted view, no im2col
        w = w_ref[t * cin:(t + 1) * cin, :]
        p = jnp.dot(a, w, preferred_element_type=jnp.float32)
        acc = p if acc is None else acc + p
    out = acc + t_ref[...]
    if relu:
        out = jnp.maximum(out, 0.0)
    o_ref[0] = out.astype(o_ref.dtype)


def _maxpool9_kernel(ee_ref, eo_ref, oe_ref, oo_ref, o_ref, *, oh, ow):
    """3x3/s2/p1 max-pool from the 4 even/odd row/col sub-tensors; all 9 taps
    are unit-stride slices (no strided loads, no lane slicing)."""
    m = ee_ref[0, 0:oh, 0:ow, :]
    m = jnp.maximum(m, eo_ref[0, 0:oh, 0:ow, :])
    m = jnp.maximum(m, ee_ref[0, 0:oh, 1:ow + 1, :])
    m = jnp.maximum(m, oe_ref[0, 0:oh, 0:ow, :])
    m = jnp.maximum(m, oo_ref[0, 0:oh, 0:ow, :])
    m = jnp.maximum(m, oe_ref[0, 0:oh, 1:ow + 1, :])
    m = jnp.maximum(m, ee_ref[0, 1:oh + 1, 0:ow, :])
    m = jnp.maximum(m, eo_ref[0, 1:oh + 1, 0:ow, :])
    m = jnp.maximum(m, ee_ref[0, 1:oh + 1, 1:ow + 1, :])
    o_ref[0] = m


def _avgpool_kernel(x_ref, o_ref):
    # x block: (1, HW, C) -> mean over spatial, computed in f32.
    o_ref[...] = jnp.mean(x_ref[...].astype(jnp.float32), axis=1).astype(o_ref.dtype)


# ----------------------------------------------------------------------------
# Pallas wrappers
# ----------------------------------------------------------------------------
def matmul_fused(a, b, shift, relu, identity=None, out_dtype=jnp.bfloat16):
    """out = epilogue(a @ b); a:(M,K) b:(K,N) bf16, shift:(N,) f32.

    epilogue = (+shift [+identity]) [+ReLU]. The grid is (N-tiles, M-tiles)
    with M fastest-varying, so each weight tile is DMAed once.
    """
    a = a.astype(jnp.bfloat16)
    b = b.astype(jnp.bfloat16)
    M, K = a.shape
    Kb, N = b.shape
    assert K == Kb, (K, Kb)                # callers pre-match K (no in-call pad)
    shift = shift.astype(jnp.float32).reshape(1, N)

    tm = M if M <= _TM_CAP else _TM_CAP
    tn = N if N <= _TN_CAP else _TN_CAP
    Mp = _round_up(M, tm)
    Np = _round_up(N, tn)
    if Mp != M:
        a = jnp.pad(a, ((0, Mp - M), (0, 0)))
    if Np != N:
        b = jnp.pad(b, ((0, 0), (0, Np - N)))
        shift = jnp.pad(shift, ((0, 0), (0, Np - N)))
    if identity is not None:
        identity = identity.astype(jnp.bfloat16)
        if Mp != M or Np != N:
            identity = jnp.pad(identity, ((0, Mp - M), (0, Np - N)))

    # Weight index constant across the inner (M) axis => fetched once per N-tile.
    grid = (Np // tn, Mp // tm)
    a_spec = pl.BlockSpec((tm, K), lambda j, i: (i, 0))
    b_spec = pl.BlockSpec((K, tn), lambda j, i: (0, j))
    t_spec = pl.BlockSpec((1, tn), lambda j, i: (0, j))
    o_spec = pl.BlockSpec((tm, tn), lambda j, i: (i, j))

    cost = pl.CostEstimate(
        flops=2 * M * N * K,
        transcendentals=0,
        bytes_accessed=int(a.size * 2 + b.size * 2
                           + Mp * Np * jnp.dtype(out_dtype).itemsize
                           + (0 if identity is None else identity.size * 2)))
    cparams = pltpu.CompilerParams(
        dimension_semantics=("parallel", "parallel"),
        vmem_limit_bytes=_VMEM_LIMIT)

    if identity is None:
        out = pl.pallas_call(
            functools.partial(_matmul_bn_kernel, relu=relu),
            out_shape=jax.ShapeDtypeStruct((Mp, Np), out_dtype),
            grid=grid,
            in_specs=[a_spec, b_spec, t_spec],
            out_specs=o_spec,
            compiler_params=cparams,
            cost_estimate=cost,
        )(a, b, shift)
    else:
        out = pl.pallas_call(
            functools.partial(_matmul_bn_res_kernel, relu=relu),
            out_shape=jax.ShapeDtypeStruct((Mp, Np), out_dtype),
            grid=grid,
            in_specs=[a_spec, b_spec, t_spec, o_spec],
            out_specs=o_spec,
            compiler_params=cparams,
            cost_estimate=cost,
        )(a, b, shift, identity)

    if Mp != M or Np != N:
        out = out[:M, :N]
    return out


def conv3x3_s1(x, cp, relu=True):
    """3x3, stride-1, pad-1 conv + folded BN (+ReLU) with NO im2col.

    The padded image is flattened to rows; the output is produced on an
    (H, W+2) grid (2 garbage columns per row, sliced off afterwards)."""
    N, H, W, C = x.shape
    Cout = cp["cout"]
    assert cp["w"].shape[0] == 9 * C
    Wp = W + 2
    # Pad top by 1, bottom by 2 rows so the trailing garbage rows stay in-bounds.
    xp = jnp.pad(x, ((0, 0), (1, 2), (1, 1), (0, 0)))
    Lp = (H + 3) * Wp
    xf = xp.reshape(N, Lp, C)
    R = H * Wp
    offsets = [di * Wp + dj for di in range(3) for dj in range(3)]

    tn = Cout if Cout <= _TN_CAP else _TN_CAP
    assert Cout % tn == 0
    grid = (Cout // tn, N)            # weight tile outer (fetched once), batch inner

    cost = pl.CostEstimate(
        flops=2 * N * R * 9 * C * Cout,
        transcendentals=0,
        bytes_accessed=int(xf.size * 2 + cp["w"].size * 2 + N * R * Cout * 2))

    out = pl.pallas_call(
        functools.partial(_conv3x3_taps_kernel, offsets=offsets, cin=C, relu=relu),
        out_shape=jax.ShapeDtypeStruct((N, R, Cout), jnp.bfloat16),
        grid=grid,
        in_specs=[
            pl.BlockSpec((1, Lp, C), lambda j, n: (n, 0, 0)),
            pl.BlockSpec((9 * C, tn), lambda j, n: (0, j)),
            pl.BlockSpec((1, tn), lambda j, n: (0, j)),
        ],
        out_specs=pl.BlockSpec((1, R, tn), lambda j, n: (n, 0, j)),
        compiler_params=pltpu.CompilerParams(
            dimension_semantics=("parallel", "parallel"),
            vmem_limit_bytes=_VMEM_LIMIT),
        cost_estimate=cost,
    )(xf, cp["w"], cp["shift"].reshape(1, Cout))

    return out.reshape(N, H, Wp, Cout)[:, :, :W, :]


def maxpool_3x3_s2(x):
    """MaxPool2d(kernel=3, stride=2, padding=1) on NHWC (bf16), even H/W."""
    N, H, W, C = x.shape
    assert H % 2 == 0 and W % 2 == 0
    OH, OW = H // 2, W // 2
    # Input is post-ReLU (>= 0) so zero padding is exactly equivalent to -inf.
    xp = jnp.pad(x, ((0, 0), (1, 1), (1, 1), (0, 0)))
    # Even/odd row/col split: together exactly 1x the padded tensor.
    ee = xp[:, 0::2, 0::2, :]
    eo = xp[:, 0::2, 1::2, :]
    oe = xp[:, 1::2, 0::2, :]
    oo = xp[:, 1::2, 1::2, :]

    in_spec = pl.BlockSpec((1, OH + 1, OW + 1, C), lambda n: (n, 0, 0, 0))
    out = pl.pallas_call(
        functools.partial(_maxpool9_kernel, oh=OH, ow=OW),
        out_shape=jax.ShapeDtypeStruct((N, OH, OW, C), x.dtype),
        grid=(N,),
        in_specs=[in_spec] * 4,
        out_specs=pl.BlockSpec((1, OH, OW, C), lambda n: (n, 0, 0, 0)),
        compiler_params=pltpu.CompilerParams(dimension_semantics=("parallel",)),
    )(ee, eo, oe, oo)
    return out


def global_avgpool(x):
    """AdaptiveAvgPool2d((1,1)) on NHWC -> (N, C), gridded over the batch."""
    N, H, W, C = x.shape
    xf = x.reshape(N, H * W, C)
    return pl.pallas_call(
        _avgpool_kernel,
        out_shape=jax.ShapeDtypeStruct((N, C), x.dtype),
        grid=(N,),
        in_specs=[pl.BlockSpec((1, H * W, C), lambda n: (n, 0, 0))],
        out_specs=pl.BlockSpec((1, C), lambda n: (n, 0)),
        compiler_params=pltpu.CompilerParams(dimension_semantics=("parallel",)),
    )(xf)


# ----------------------------------------------------------------------------
# Conv-as-matmul glue (only conv1 7x7/s2 and the three stride-2 3x3 convs)
# ----------------------------------------------------------------------------
def _im2col(x, kh, kw, stride, pad, k_target=None):
    """x: NHWC -> (N*OH*OW, kh*kw*C), (kh, kw) outer / C inner ordering."""
    N, H, W, C = x.shape
    xp = jnp.pad(x, ((0, 0), (pad, pad), (pad, pad), (0, 0)))
    OH = (H + 2 * pad - kh) // stride + 1
    OW = (W + 2 * pad - kw) // stride + 1
    cols = []
    for i in range(kh):
        for j in range(kw):
            cols.append(xp[:, i:i + stride * OH:stride,
                           j:j + stride * OW:stride, :])
    col = jnp.stack(cols, axis=-2)                     # (N, OH, OW, kh*kw, C)
    a = col.reshape(N * OH * OW, kh * kw * C)
    if k_target is not None and k_target != a.shape[1]:
        a = jnp.pad(a, ((0, 0), (0, k_target - a.shape[1])))   # conv1 only
    return a, OH, OW


def conv_im2col(x, cp, stride, pad, relu):
    N = x.shape[0]
    a, OH, OW = _im2col(x, cp["kh"], cp["kw"], stride, pad,
                        k_target=cp["w"].shape[0])
    out = matmul_fused(a, cp["w"], cp["shift"], relu=relu)
    return out.reshape(N, OH, OW, cp["cout"])


def conv1x1(x, cp, stride, relu, identity=None):
    N, H, W, C = x.shape
    xs = x if stride == 1 else x[:, ::stride, ::stride, :]
    _, OH, OW, _ = xs.shape
    a = xs.reshape(-1, C)
    id_flat = None if identity is None else identity.reshape(-1, cp["cout"])
    out = matmul_fused(a, cp["w"], cp["shift"], relu=relu, identity=id_flat)
    return out.reshape(N, OH, OW, cp["cout"])


# ----------------------------------------------------------------------------
# Parameter construction (deterministic, synthetic) + matmul-ready prep
# ----------------------------------------------------------------------------
def _kaiming_conv(key, o, c, kh, kw):
    fan_in = c * kh * kw
    return (jax.random.normal(key, (o, c, kh, kw), jnp.float32)
            * np.sqrt(2.0 / fan_in))


def _bn_params(c):
    return dict(gamma=jnp.ones((c,), jnp.float32),
                beta=jnp.zeros((c,), jnp.float32),
                mean=jnp.zeros((c,), jnp.float32),
                var=jnp.ones((c,), jnp.float32))


def make_resnet50_params(key):
    keys = iter(jax.random.split(key, 256))
    p = {}
    p["conv1"] = _kaiming_conv(next(keys), 64, 3, 7, 7)
    p["bn1"] = _bn_params(64)
    cfg = [(64, 3, 1), (128, 4, 2), (256, 6, 2), (512, 3, 2)]
    inplanes = 64
    for li, (planes, nblocks, stride) in enumerate(cfg):
        blocks = []
        for bi in range(nblocks):
            s = stride if bi == 0 else 1
            blk = {
                "stride": s,
                "conv1": _kaiming_conv(next(keys), planes, inplanes, 1, 1),
                "bn1": _bn_params(planes),
                "conv2": _kaiming_conv(next(keys), planes, planes, 3, 3),
                "bn2": _bn_params(planes),
                "conv3": _kaiming_conv(next(keys), planes * 4, planes, 1, 1),
                "bn3": _bn_params(planes * 4),
            }
            if bi == 0:  # downsample branch (1x1 conv + BN)
                blk["ds_conv"] = _kaiming_conv(next(keys), planes * 4, inplanes, 1, 1)
                blk["ds_bn"] = _bn_params(planes * 4)
            blocks.append(blk)
            inplanes = planes * 4
        p[f"layer{li + 1}"] = blocks
    return p


def make_classblock_params(key, input_dim=2048, class_num=10, num_bottleneck=512):
    k1, k2, k3 = jax.random.split(key, 3)
    fc1_w = (jax.random.normal(k1, (num_bottleneck, input_dim), jnp.float32)
             * np.sqrt(2.0 / num_bottleneck))
    fc1_b = jnp.zeros((num_bottleneck,), jnp.float32)
    bn = dict(gamma=1.0 + 0.02 * jax.random.normal(k2, (num_bottleneck,), jnp.float32),
              beta=jnp.zeros((num_bottleneck,), jnp.float32),
              mean=jnp.zeros((num_bottleneck,), jnp.float32),
              var=jnp.ones((num_bottleneck,), jnp.float32))
    fc2_w = jax.random.normal(k3, (class_num, num_bottleneck), jnp.float32) * 0.001
    fc2_b = jnp.zeros((class_num,), jnp.float32)
    return dict(fc1_w=fc1_w, fc1_b=fc1_b, bn=bn, fc2_w=fc2_w, fc2_b=fc2_b)


def _prepare_conv(w, bn, eps=1e-5):
    """OIHW conv weight + eval-mode BN -> (K, O) bf16 matrix (BN scale folded)."""
    O, C, kh, kw = w.shape
    s = bn["gamma"] / jnp.sqrt(bn["var"] + eps)
    t = bn["beta"] - bn["mean"] * s
    wm = jnp.transpose(w, (2, 3, 1, 0)).reshape(kh * kw * C, O) * s[None, :]
    wm = wm.astype(jnp.bfloat16)
    K = kh * kw * C
    Kp = _round_up(K, 16)                    # only conv1 (147 -> 160) is padded
    if Kp != K:
        wm = jnp.pad(wm, ((0, Kp - K), (0, 0)))
    return dict(w=wm, shift=t.astype(jnp.float32), kh=kh, kw=kw, cout=O)


def prepare_resnet_params(params):
    prep = {"conv1": _prepare_conv(params["conv1"], params["bn1"])}
    for li in range(1, 5):
        blocks = []
        for blk in params[f"layer{li}"]:
            b = {"stride": blk["stride"],
                 "conv1": _prepare_conv(blk["conv1"], blk["bn1"]),
                 "conv2": _prepare_conv(blk["conv2"], blk["bn2"]),
                 "conv3": _prepare_conv(blk["conv3"], blk["bn3"])}
            if "ds_conv" in blk:
                b["ds"] = _prepare_conv(blk["ds_conv"], blk["ds_bn"])
            blocks.append(b)
        prep[f"layer{li}"] = blocks
    return prep


def prepare_classblock_params(cparams, eps=1e-5):
    s = cparams["bn"]["gamma"] / jnp.sqrt(cparams["bn"]["var"] + eps)
    t = cparams["bn"]["beta"] - cparams["bn"]["mean"] * s
    w1 = (cparams["fc1_w"].T * s[None, :]).astype(jnp.bfloat16)     # (2048, 512)
    shift1 = (s * cparams["fc1_b"] + t).astype(jnp.float32)
    class_num, nb = cparams["fc2_w"].shape
    ncp = _round_up(class_num, 128)          # lane-dense classifier output
    w2 = jnp.zeros((nb, ncp), jnp.bfloat16)
    w2 = w2.at[:, :class_num].set(cparams["fc2_w"].T.astype(jnp.bfloat16))
    shift2 = jnp.zeros((ncp,), jnp.float32).at[:class_num].set(
        cparams["fc2_b"].astype(jnp.float32))
    return dict(w1=w1, shift1=shift1, w2=w2, shift2=shift2, class_num=class_num)


# ----------------------------------------------------------------------------
# Forward pass
# ----------------------------------------------------------------------------
def bottleneck_forward(x, blk):
    stride = blk["stride"]
    out = conv1x1(x, blk["conv1"], stride=1, relu=True)
    if stride == 1:
        out = conv3x3_s1(out, blk["conv2"], relu=True)
    else:
        # TODO(synk): the three stride-2 3x3 convs still use im2col.
        out = conv_im2col(out, blk["conv2"], stride=stride, pad=1, relu=True)
    if "ds" in blk:
        identity = conv1x1(x, blk["ds"], stride=stride, relu=False)
    else:
        identity = x
    # conv3 + BN + residual add + ReLU fused into one matmul epilogue
    return conv1x1(out, blk["conv3"], stride=1, relu=True, identity=identity)


def ft_net_forward(x_nchw, prep, cprep):
    # NCHW (PyTorch) -> NHWC (TPU-friendly), bf16 activations
    x = jnp.transpose(x_nchw, (0, 2, 3, 1)).astype(jnp.bfloat16)

    x = conv_im2col(x, prep["conv1"], stride=2, pad=3, relu=True)   # conv1+bn1+relu
    x = maxpool_3x3_s2(x)                                           # maxpool

    for li in range(1, 5):                                          # layer1..layer4
        for blk in prep[f"layer{li}"]:
            x = bottleneck_forward(x, blk)

    feat = global_avgpool(x)                                        # (N, 2048)

    # ClassBlock: Linear -> BatchNorm1d (fused) -> Dropout(eval) -> Linear
    h = matmul_fused(feat, cprep["w1"], cprep["shift1"], relu=False)
    logits = matmul_fused(h, cprep["w2"], cprep["shift2"], relu=False,
                          out_dtype=jnp.float32)
    return logits[:, :cprep["class_num"]]


# ----------------------------------------------------------------------------
if __name__ == "__main__":
    CLASS_NUM = 10
    key = jax.random.PRNGKey(0)
    k_x, k_res, k_cls = jax.random.split(key, 3)

    # Small-but-consistent input: batch=2, RGB, 32x32 (spatially reduced 32x).
    x = jax.random.normal(k_x, (2, 3, 32, 32), jnp.float32)

    params = make_resnet50_params(k_res)
    cparams = make_classblock_params(k_cls, input_dim=2048, class_num=CLASS_NUM)
    prep = prepare_resnet_params(params)
    cprep = prepare_classblock_params(cparams)

    logits = ft_net_forward(x, prep, cprep)
    logits = jax.block_until_ready(logits)

    assert logits.shape == (2, CLASS_NUM), logits.shape
    assert bool(jnp.all(jnp.isfinite(logits)))
    print("KERNEL_OK")
</pallas_src>

<mosaic_0001>
module attributes {stable_mosaic.version = 11 : i64} {
  func.func @_matmul_bn_kernel(%arg0: i32, %arg1: i32, %arg2: memref<256x160xbf16, #tpu.memory_space<vmem>>, %arg3: memref<160x64xbf16, #tpu.memory_space<vmem>>, %arg4: memref<1x64xf32, #tpu.memory_space<vmem>>, %arg5: memref<256x64xbf16, #tpu.memory_space<vmem>>) attributes {dimension_semantics = [#tpu.dimension_semantics<parallel>, #tpu.dimension_semantics<parallel>], iteration_bounds = array<i64: 1, 2>, scalar_prefetch = 0 : i64, scratch_operands = 0 : i64, tpu.core_type = #tpu.core_type<tc>, window_params = [{transform_indices = @transform_0, window_bounds = array<i64: 256, 160>}, {transform_indices = @transform_1, window_bounds = array<i64: 160, 64>}, {transform_indices = @transform_2, window_bounds = array<i64: 1, 64>}, {transform_indices = @transform_3, window_bounds = array<i64: 256, 64>}]} {
    %c0 = arith.constant 0 : index
    %c0_0 = arith.constant 0 : index
    %0 = vector.load %arg2[%c0, %c0_0] : memref<256x160xbf16, #tpu.memory_space<vmem>>, vector<256x160xbf16>
    %c0_1 = arith.constant 0 : index
    %c0_2 = arith.constant 0 : index
    %1 = vector.load %arg3[%c0_1, %c0_2] : memref<160x64xbf16, #tpu.memory_space<vmem>>, vector<160x64xbf16>
    %cst = arith.constant dense<0.000000e+00> : vector<256x64xf32>
    %2 = tpu.matmul %0, %1, %cst {dimension_numbers = #tpu.dot_dimension_numbers<[1], [0], [0], [1], [0, 0, 1, 1], [], []>} : vector<256x160xbf16>, vector<160x64xbf16>, vector<256x64xf32> -> vector<256x64xf32>
    %c0_3 = arith.constant 0 : index
    %c0_4 = arith.constant 0 : index
    %3 = vector.load %arg4[%c0_3, %c0_4] : memref<1x64xf32, #tpu.memory_space<vmem>>, vector<1x64xf32>
    %4 = vector.broadcast %3 : vector<1x64xf32> to vector<256x64xf32>
    %5 = arith.addf %2, %4 : vector<256x64xf32>
    %cst_5 = arith.constant 0.000000e+00 : f32
    %6 = vector.broadcast %cst_5 : f32 to vector<256x64xf32>
    %7 = arith.maximumf %5, %6 : vector<256x64xf32>
    %8 = arith.truncf %7 : vector<256x64xf32> to vector<256x64xbf16>
    %c0_6 = arith.constant 0 : index
    %c0_7 = arith.constant 0 : index
    %9 = vector.load %arg5[%c0_6, %c0_7] : memref<256x64xbf16, #tpu.memory_space<vmem>>, vector<256x64xbf16>
    tpu.vector_store %arg5[%c0_6, %c0_7], %8 {strides = array<i32>} : memref<256x64xbf16, #tpu.memory_space<vmem>>, vector<256x64xbf16>,
    return
  }
  func.func @transform_0(%arg0: i32, %arg1: i32) -> (i32, i32) {
    %c0_i32 = arith.constant 0 : i32
    %c0_i32_0 = arith.constant 0 : i32
    return %arg1, %c0_i32 : i32, i32
  }
  func.func @transform_1(%arg0: i32, %arg1: i32) -> (i32, i32) {
    %c0_i32 = arith.constant 0 : i32
    %c0_i32_0 = arith.constant 0 : i32
    return %c0_i32, %arg0 : i32, i32
  }
  func.func @transform_2(%arg0: i32, %arg1: i32) -> (i32, i32) {
    %c0_i32 = arith.constant 0 : i32
    %c0_i32_0 = arith.constant 0 : i32
    return %c0_i32, %arg0 : i32, i32
  }
  func.func @transform_3(%arg0: i32, %arg1: i32) -> (i32, i32) {
    %c0_i32 = arith.constant 0 : i32
    return %arg1, %arg0 : i32, i32
  }
}

</mosaic_0001>

<llo_original>
// kernel: tpu_custom_call.1
$region0: #{tpu_custom_call.1}
  #allocation0 [shape = 'u32[]', space=smem, size = 0x4, offset = 0x4, fixed_abs, tag = 'smem constant byte address 0x4 - core index']
  #allocation1 [shape = 'u32[144,128]{1,0:T(1,128)}', space=vmem, size = 0x12000, scoped, tag = 'internal scratch']
  %s0 = inlined_call_operand.vmem [shape: bf16[512,160], index: 0, kind: input, shape index: {}]
  %s1 = inlined_call_operand.vmem [shape: bf16[160,64], index: 1, kind: input, shape index: {}]
  %s2 = inlined_call_operand.vmem [shape: f32[1,64], index: 2, kind: input, shape index: {}]
  %s3 = inlined_call_operand.vmem [shape: bf16[512,64], index: 3, kind: output, shape index: {}]
  %s4 = sld [smem:[#allocation0]]
  $region45: #{tpu_custom_call.1} parent=0
    _
  %s6 = ssub.s32 1, %s4
  %s7 = scalar_select 0, %s6, %s4
  loop: start=0, step=1, limit=4
  $region2: #{tpu_custom_call.1} parent=0 // loop_pre_header
    _
  $region3: #{tpu_custom_call.1} parent=0 // loop_header
    %s9 = sphi 0, %s13
    %p10 = scmp.ge.s32.totalorder %s9, 4
    %s16 = sphi 0, %s28
    %s17 = sphi 0, %s24
    %s18 = sphi 0, %s16
    %s19 = sphi 0, %s17
    %s20 = sphi 0, %s18
    %s21 = sphi 0, %s19
    %s31 = sphi 0, %s33
    %s34 = sphi 0, %s31
    %s35 = sphi 0, %s34
    %s51 = sphi 0, %s35
    %s57 = sphi 0, %s59
    %s60 = sphi 0, %s57
    %s61 = sphi 0, %s60
    %s77 = sphi 0, %s61
    %s83 = sphi 0, %s85
    %s86 = sphi 0, %s83
    %s87 = sphi 0, %s86
    %s103 = sphi 0, %s87
    %s111 = sphi 0, %s113
    %s114 = sphi 0, %s111
    %s115 = sphi 0, %s114
    %s131 = sphi 0, %s115
  $region4: #{tpu_custom_call.1} parent=0 // loop_header_branch
    %12 = sbr.rel (%p10) target = $region8
  $region5: #{tpu_custom_call.1} parent=0 // loop_body
    %s14 = ssub.s32 %s9, 1
    %s15 = ssub.s32 %s9, 2
    %s22 = sadd.s32 1, %s17
    %p23 = scmp.ge.s32.totalorder %s22, 2
    %s24 = scalar_select %p23, 0, %s22
    %s25 = sadd.s32 1, %s16
    %s26 = scalar_select %p23, %s25, %s16
    %p27 = scmp.ge.s32.totalorder %s26, 1
    %s28 = scalar_select %p27, 0, %s26
    %s29 = ssub.s32 %s17, %s24
    %p30 = scmp.eq.s32.totalorder %s29, 0
    %s32 = sadd.s32 %s31, 1
    %s33 = scalar_select %p30, %s31, %s32
    %p36 = pneg %p30
    %p37 = scmp.eq.s32.totalorder %s9, 1
    %p38 = por %p36, %p37
    %p39 = scmp.ne.s32.totalorder %s31, %s34
    %p40 = scmp.eq.s32.totalorder %s9, 0
    %p41 = por %p39, %p40
    %p42 = scmp.ne.s32.totalorder %s31, %s34
    %p43 = scmp.eq.s32.totalorder %s14, 1
    %p44 = por %p42, %p43
    %p45 = scmp.ne.s32.totalorder %s34, %s35
    %p46 = scmp.eq.s32.totalorder %s14, 0
    %p47 = por %p45, %p46
    %p48 = scmp.ne.s32.totalorder %s34, %s35
    %p49 = scmp.eq.s32.totalorder %s15, 1
    %p50 = por %p48, %p49
    %p52 = scmp.ne.s32.totalorder %s35, %s51
    %p53 = scmp.eq.s32.totalorder %s15, 0
    %p54 = por %p52, %p53
    %s55 = ssub.s32 %s16, %s28
    %p56 = scmp.eq.s32.totalorder %s55, 0
    %s58 = sadd.s32 %s57, 1
    %s59 = scalar_select %p56, %s57, %s58
    %p62 = pneg %p56
    %p63 = scmp.eq.s32.totalorder %s9, 1
    %p64 = por %p62, %p63
    %p65 = scmp.ne.s32.totalorder %s57, %s60
    %p66 = scmp.eq.s32.totalorder %s9, 0
    %p67 = por %p65, %p66
    %p68 = scmp.ne.s32.totalorder %s57, %s60
    %p69 = scmp.eq.s32.totalorder %s14, 1
    %p70 = por %p68, %p69
    %p71 = scmp.ne.s32.totalorder %s60, %s61
    %p72 = scmp.eq.s32.totalorder %s14, 0
    %p73 = por %p71, %p72
    %p74 = scmp.ne.s32.totalorder %s60, %s61
    %p75 = scmp.eq.s32.totalorder %s15, 1
    %p76 = por %p74, %p75
    %p78 = scmp.ne.s32.totalorder %s61, %s77
    %p79 = scmp.eq.s32.totalorder %s15, 0
    %p80 = por %p78, %p79
    %s81 = ssub.s32 %s16, %s28
    %p82 = scmp.eq.s32.totalorder %s81, 0
    %s84 = sadd.s32 %s83, 1
    %s85 = scalar_select %p82, %s83, %s84
    %p88 = pneg %p82
    %p89 = scmp.eq.s32.totalorder %s9, 1
    %p90 = por %p88, %p89
    %p91 = scmp.ne.s32.totalorder %s83, %s86
    %p92 = scmp.eq.s32.totalorder %s9, 0
    %p93 = por %p91, %p92
    %p94 = scmp.ne.s32.totalorder %s83, %s86
    %p95 = scmp.eq.s32.totalorder %s14, 1
    %p96 = por %p94, %p95
    %p97 = scmp.ne.s32.totalorder %s86, %s87
    %p98 = scmp.eq.s32.totalorder %s14, 0
    %p99 = por %p97, %p98
    %p100 = scmp.ne.s32.totalorder %s86, %s87
    %p101 = scmp.eq.s32.totalorder %s15, 1
    %p102 = por %p100, %p101
    %p104 = scmp.ne.s32.totalorder %s87, %s103
    %p105 = scmp.eq.s32.totalorder %s15, 0
    %p106 = por %p104, %p105
    %s107 = ssub.s32 %s17, %s24
    %s108 = ssub.s32 %s16, %s28
    %s109 = sor.u32 %s107, %s108
    %p110 = scmp.eq.s32.totalorder %s109, 0
    %s112 = sadd.s32 %s111, 1
    %s113 = scalar_select %p110, %s111, %s112
    %p116 = pneg %p110
    %p117 = scmp.eq.s32.totalorder %s9, 1
    %p118 = por %p116, %p117
    %p119 = scmp.ne.s32.totalorder %s111, %s114
    %p120 = scmp.eq.s32.totalorder %s9, 0
    %p121 = por %p119, %p120
    %p122 = scmp.ne.s32.totalorder %s111, %s114
    %p123 = scmp.eq.s32.totalorder %s14, 1
    %p124 = por %p122, %p123
    %p125 = scmp.ne.s32.totalorder %s114, %s115
    %p126 = scmp.eq.s32.totalorder %s14, 0
    %p127 = por %p125, %p126
    %p128 = scmp.ne.s32.totalorder %s114, %s115
    %p129 = scmp.eq.s32.totalorder %s15, 1
    %p130 = por %p128, %p129
    %p132 = scmp.ne.s32.totalorder %s115, %s131
    %p133 = scmp.eq.s32.totalorder %s15, 0
    %p134 = por %p132, %p133
    %p135 = scmp.le.s32.totalorder 1, %s9
    %p136 = scmp.lt.s32.totalorder %s9, 3
    %p137 = pnand %p135, %p136
    %p138 = pneg %p137
    // Predicated region
    $region9: #{tpu_custom_call.1} parent=5 // pred_check
      _
    $region10: #{tpu_custom_call.1} parent=5 // pred_check_branch
      %140 = sbr.rel (%p137) target = $region12
    $region11: #{tpu_custom_call.1} parent=5 // pred_region
      %s141 = ssub.s32 %s9, 1
      // Predicated region
      $region13: #{tpu_custom_call.1} parent=11 // pred_check
        %p142 = pneg %p73
      $region14: #{tpu_custom_call.1} parent=11 // pred_check_branch
        %144 = sbr.rel (%p142) target = $region16
      $region15: #{tpu_custom_call.1} parent=11 // pred_region
        %p145 = scmp.lt.s32.totalorder %s18, 0
        %s146 = scalar_select %p145, %s18, 0
        %s147 = smul.addr %s146, 4
        %s148 = scalar_lea.vmem %s1, %s147
      $region16: #{tpu_custom_call.1} parent=11 // pred_fallthru
        _
      // Predicated region
      $region17: #{tpu_custom_call.1} parent=11 // pred_check
        %p149 = pneg %p99
      $region18: #{tpu_custom_call.1} parent=11 // pred_check_branch
        %151 = sbr.rel (%p149) target = $region20
      $region19: #{tpu_custom_call.1} parent=11 // pred_region
        %p152 = scmp.lt.s32.totalorder %s18, 0
        %s153 = scalar_select %p152, %s18, 0
        %s154 = scalar_lea.vmem %s2, %s153
      $region20: #{tpu_custom_call.1} parent=11 // pred_fallthru
        _
    $region12: #{tpu_custom_call.1} parent=5 // pred_fallthru
      _
    %p155 = scmp.lt.s32.totalorder %s9, 2
    // Predicated region
    $region21: #{tpu_custom_call.1} parent=5 // pred_check
      %p156 = pneg %p155
    $region22: #{tpu_custom_call.1} parent=5 // pred_check_branch
      %158 = sbr.rel (%p156) target = $region24
    $region23: #{tpu_custom_call.1} parent=5 // pred_region
      // Predicated region
      $region25: #{tpu_custom_call.1} parent=23 // pred_check
        %p159 = pneg %p41
      $region26: #{tpu_custom_call.1} parent=23 // pred_check_branch
        %161 = sbr.rel (%p159) target = $region28
      $region27: #{tpu_custom_call.1} parent=23 // pred_region
        %s162 = smul.u32 32, %s17
        %p163 = scmp.lt.s32.totalorder %s162, 63
        %s164 = scalar_select %p163, %s162, 63
        %s165 = smul.addr %s164, 2
        %s166 = smul.addr %s165, 4
        %s167 = scalar_lea.vmem %s0, %s166
        %s168 = smul.u32 32, %s17
      $region28: #{tpu_custom_call.1} parent=23 // pred_fallthru
        _
    $region24: #{tpu_custom_call.1} parent=5 // pred_fallthru
      _
    %p169 = scmp.le.s32.totalorder 1, %s9
    %p170 = scmp.lt.s32.totalorder %s9, 3
    %p171 = pnand %p169, %p170
    %p172 = pneg %p171
    // Predicated region
    $region29: #{tpu_custom_call.1} parent=5 // pred_check
      _
    $region30: #{tpu_custom_call.1} parent=5 // pred_check_branch
      %174 = sbr.rel (%p171) target = $region32
    $region31: #{tpu_custom_call.1} parent=5 // pred_region
      %s175 = ssub.s32 %s9, 1
      %s176 = smul.u32 32, %s19
      %p177 = scmp.lt.s32.totalorder %s176, 63
      %s178 = scalar_select %p177, %s176, 63
      %s179 = smul.addr %s178, 2
      %s180 = smul.addr %s179, 4
      %s181 = scalar_lea.vmem %s0, %s180
      %p182 = pneg %p47
      %p183 = pneg %p44
      %p184 = scmp.lt.s32.totalorder %s18, 0
      %s185 = scalar_select %p184, %s18, 0
      %s186 = smul.addr %s185, 4
      %s187 = scalar_lea.vmem %s1, %s186
      %p188 = pneg %p73
      %p189 = pneg %p70
      %p190 = scmp.lt.s32.totalorder %s18, 0
      %s191 = scalar_select %p190, %s18, 0
      %s192 = scalar_lea.vmem %s2, %s191
      %p193 = pneg %p99
      %p194 = pneg %p96
      %p195 = pneg %p127
      %p196 = pneg %p124
      %s197 = smul.u32 32, %s19
      %p198 = scmp.lt.s32.totalorder %s197, 63
      %s199 = scalar_select %p198, %s197, 63
      %p200 = scmp.lt.s32.totalorder %s18, 0
      %s201 = scalar_select %p200, %s18, 0
      %s202 = sadd.s32 %s201, %s199
      %s203 = smul.addr %s202, 4
      %s204 = scalar_lea.vmem %s3, %s203
      %s205 = smul.u32 32, %s19
      %p206 = scmp.lt.s32.totalorder %s205, 63
      %s207 = scalar_select %p206, %s205, 63
      %s208 = smul.addr %s207, 2
      %s209 = smul.addr %s208, 4
      %s210 = scalar_lea.vmem %s0, %s209
      %s211 = smul.u32 32, %s19
      %p212 = scmp.lt.s32.totalorder %s18, 0
      %s213 = scalar_select %p212, %s18, 0
      %s214 = smul.addr %s213, 4
      %s215 = scalar_lea.vmem %s1, %s214
      %p216 = scmp.lt.s32.totalorder %s18, 0
      %s217 = scalar_select %p216, %s18, 0
      %s218 = scalar_lea.vmem %s2, %s217
      %s219 = smul.u32 32, %s19
      %p220 = scmp.lt.s32.totalorder %s219, 63
      %s221 = scalar_select %p220, %s219, 63
      %p222 = scmp.lt.s32.totalorder %s18, 0
      %s223 = scalar_select %p222, %s18, 0
      %s224 = sadd.s32 %s223, %s221
      %s225 = smul.addr %s224, 4
      %s226 = scalar_lea.vmem %s3, %s225
      %s227 = smul.u32 32, %s19
      %v229 = vld [vmem:[%s210] sm:$0xff]
      %v230 = vld [vmem:[%s210 + $0x8] sm:$0xff]
      %v231 = vld [vmem:[%s210 + $0x10] sm:$0xff]
      %v232 = vld [vmem:[%s210 + $0x18] sm:$0xff]
      %v233 = vld [vmem:[%s210 + $0x20] sm:$0xff]
      %v234 = vld [vmem:[%s210 + $0x28] sm:$0xff]
      %v235 = vld [vmem:[%s210 + $0x30] sm:$0xff]
      %v236 = vld [vmem:[%s210 + $0x38] sm:$0xff]
      %v237 = vld [vmem:[%s210 + $0x40] sm:$0xff]
      %v238 = vld [vmem:[%s210 + $0x48] sm:$0xff]
      %v239 = vld [vmem:[%s210 + $0x50] sm:$0xff]
      %v240 = vld [vmem:[%s210 + $0x58] sm:$0xff]
      %v241 = vld [vmem:[%s210 + $0x60] sm:$0xff]
      %v242 = vld [vmem:[%s210 + $0x68] sm:$0xff]
      %v243 = vld [vmem:[%s210 + $0x70] sm:$0xff]
      %v244 = vld [vmem:[%s210 + $0x78] sm:$0xff]
      %v245 = vld [vmem:[%s210 + $0x80] sm:$0xff]
      %v246 = vld [vmem:[%s210 + $0x88] sm:$0xff]
      %v247 = vld [vmem:[%s210 + $0x90] sm:$0xff]
      %v248 = vld [vmem:[%s210 + $0x98] sm:$0xff]
      %v249 = vld [vmem:[%s210 + $0xa0] sm:$0xff]
      %v250 = vld [vmem:[%s210 + $0xa8] sm:$0xff]
      %v251 = vld [vmem:[%s210 + $0xb0] sm:$0xff]
      %v252 = vld [vmem:[%s210 + $0xb8] sm:$0xff]
      %v253 = vld [vmem:[%s210 + $0xc0] sm:$0xff]
      %v254 = vld [vmem:[%s210 + $0xc8] sm:$0xff]
      %v255 = vld [vmem:[%s210 + $0xd0] sm:$0xff]
      %v256 = vld [vmem:[%s210 + $0xd8] sm:$0xff]
      %v257 = vld [vmem:[%s210 + $0xe0] sm:$0xff]
      %v258 = vld [vmem:[%s210 + $0xe8] sm:$0xff]
      %v259 = vld [vmem:[%s210 + $0xf0] sm:$0xff]
      %v260 = vld [vmem:[%s210 + $0xf8] sm:$0xff]
      %v261 = vld [vmem:[%s215] sm:$0xf]
      %v262 = vld [vmem:[%s215 + $0x4] sm:$0xf]
      %v263 = vld [vmem:[%s215 + $0x8] sm:$0xf]
      %v264 = vld [vmem:[%s215 + $0xc] sm:$0xf]
      %v265 = vld [vmem:[%s215 + $0x10] sm:$0xf]
      %v266 = vld [vmem:[%s215 + $0x14] sm:$0xf]
      %v267 = vld [vmem:[%s215 + $0x18] sm:$0xf]
      %v268 = vld [vmem:[%s215 + $0x1c] sm:$0xf]
      %v269 = vld [vmem:[%s215 + $0x20] sm:$0xf]
      %v270 = vld [vmem:[%s215 + $0x24] sm:$0xf]
      %v271 = vld [vmem:[%s215 + $0x28] sm:$0xf]
      %v272 = vld [vmem:[%s215 + $0x2c] sm:$0xf]
      %v273 = vld [vmem:[%s215 + $0x30] sm:$0xf]
      %v274 = vld [vmem:[%s215 + $0x34] sm:$0xf]
      %v275 = vld [vmem:[%s215 + $0x38] sm:$0xf]
      %v276 = vld [vmem:[%s215 + $0x3c] sm:$0xf]
      %v277 = vld [vmem:[%s215 + $0x40] sm:$0xf]
      %v278 = vld [vmem:[%s215 + $0x44] sm:$0xf]
      %v279 = vld [vmem:[%s215 + $0x48] sm:$0xf]
      %v280 = vld [vmem:[%s215 + $0x4c] sm:$0xf]
      %v281 = vld [vmem:[%s218] sm:$0x1]
      %v283 = vlaneseq
      %v284 = vshrl.u32 %v283, 7
      %v285 = vsub.s32 0, %v284
      %v286 = vrot.slane %v281, %v285
      %v320 = vunpack.c.l.b16 %v229
      %v321 = vunpack.c.h.b16 %v229
      %v322 = vunpack.c.l.b16 %v230
      %v323 = vunpack.c.h.b16 %v230
      %v324 = vunpack.c.l.b16 %v231
      %v325 = vunpack.c.h.b16 %v231
      %v326 = vunpack.c.l.b16 %v232
      %v327 = vunpack.c.h.b16 %v232
      %v328 = vunpack.c.l.b16 %v233
      %v329 = vunpack.c.h.b16 %v233
      %v330 = vunpack.c.l.b16 %v234
      %v331 = vunpack.c.h.b16 %v234
      %v332 = vunpack.c.l.b16 %v235
      %v333 = vunpack.c.h.b16 %v235
      %v334 = vunpack.c.l.b16 %v236
      %v335 = vunpack.c.h.b16 %v236
      %v336 = vunpack.c.l.b16 %v237
      %v337 = vunpack.c.h.b16 %v237
      %v338 = vunpack.c.l.b16 %v238
      %v339 = vunpack.c.h.b16 %v238
      %v340 = vunpack.c.l.b16 %v239
      %v341 = vunpack.c.h.b16 %v239
      %v342 = vunpack.c.l.b16 %v240
      %v343 = vunpack.c.h.b16 %v240
      %v344 = vunpack.c.l.b16 %v241
      %v345 = vunpack.c.h.b16 %v241
      %v346 = vunpack.c.l.b16 %v242
      %v347 = vunpack.c.h.b16 %v242
      %v348 = vunpack.c.l.b16 %v243
      %v349 = vunpack.c.h.b16 %v243
      %v350 = vunpack.c.l.b16 %v244
      %v351 = vunpack.c.h.b16 %v244
      %v352 = vunpack.c.l.b16 %v245
      %v353 = vunpack.c.h.b16 %v245
      %v354 = vunpack.c.l.b16 %v246
      %v355 = vunpack.c.h.b16 %v246
      %v356 = vunpack.c.l.b16 %v247
      %v357 = vunpack.c.h.b16 %v247
      %v358 = vunpack.c.l.b16 %v248
      %v359 = vunpack.c.h.b16 %v248
      %v360 = vunpack.c.l.b16 %v249
      %v361 = vunpack.c.h.b16 %v249
      %v362 = vunpack.c.l.b16 %v250
      %v363 = vunpack.c.h.b16 %v250
      %v364 = vunpack.c.l.b16 %v251
      %v365 = vunpack.c.h.b16 %v251
      %v366 = vunpack.c.l.b16 %v252
      %v367 = vunpack.c.h.b16 %v252
      %v368 = vunpack.c.l.b16 %v253
      %v369 = vunpack.c.h.b16 %v253
      %v370 = vunpack.c.l.b16 %v254
      %v371 = vunpack.c.h.b16 %v254
      %v372 = vunpack.c.l.b16 %v255
      %v373 = vunpack.c.h.b16 %v255
      %v374 = vunpack.c.l.b16 %v256
      %v375 = vunpack.c.h.b16 %v256
      %v376 = vunpack.c.l.b16 %v257
      %v377 = vunpack.c.h.b16 %v257
      %v378 = vunpack.c.l.b16 %v258
      %v379 = vunpack.c.h.b16 %v258
      %v380 = vunpack.c.l.b16 %v259
      %v381 = vunpack.c.h.b16 %v259
      %v382 = vunpack.c.l.b16 %v260
      %v383 = vunpack.c.h.b16 %v260
      %v384 = vpack.c.b16 %v322, %v320
      %v385 = vpack.c.b16 %v323, %v321
      %v386 = vpack.c.b16 %v326, %v324
      %v387 = vpack.c.b16 %v327, %v325
      %v388 = vpack.c.b16 %v330, %v328
      %v389 = vpack.c.b16 %v331, %v329
      %v390 = vpack.c.b16 %v334, %v332
      %v391 = vpack.c.b16 %v335, %v333
      %v392 = vpack.c.b16 %v338, %v336
      %v393 = vpack.c.b16 %v339, %v337
      %v394 = vpack.c.b16 %v342, %v340
      %v395 = vpack.c.b16 %v343, %v341
      %v396 = vpack.c.b16 %v346, %v344
      %v397 = vpack.c.b16 %v347, %v345
      %v398 = vpack.c.b16 %v350, %v348
      %v399 = vpack.c.b16 %v351, %v349
      %v400 = vpack.c.b16 %v354, %v352
      %v401 = vpack.c.b16 %v355, %v353
      %v402 = vpack.c.b16 %v358, %v356
      %v403 = vpack.c.b16 %v359, %v357
      %v404 = vpack.c.b16 %v362, %v360
      %v405 = vpack.c.b16 %v363, %v361
      %v406 = vpack.c.b16 %v366, %v364
      %v407 = vpack.c.b16 %v367, %v365
      %v408 = vpack.c.b16 %v370, %v368
      %v409 = vpack.c.b16 %v371, %v369
      %v410 = vpack.c.b16 %v374, %v372
      %v411 = vpack.c.b16 %v375, %v373
      %v412 = vpack.c.b16 %v378, %v376
      %v413 = vpack.c.b16 %v379, %v377
      %v414 = vpack.c.b16 %v382, %v380
      %v415 = vpack.c.b16 %v383, %v381
      %v452 = vunpack.c.l.b16 %v261
      %v453 = vunpack.c.l.b16 %v262
      %v454 = vunpack.c.l.b16 %v263
      %v455 = vunpack.c.l.b16 %v264
      %v456 = vunpack.c.l.b16 %v265
      %v457 = vunpack.c.l.b16 %v266
      %v458 = vunpack.c.l.b16 %v267
      %v459 = vunpack.c.l.b16 %v268
      %v460 = vunpack.c.l.b16 %v269
      %v461 = vunpack.c.l.b16 %v270
      %v462 = vunpack.c.l.b16 %v271
      %v463 = vunpack.c.l.b16 %v272
      %v464 = vunpack.c.l.b16 %v273
      %v465 = vunpack.c.l.b16 %v274
      %v466 = vunpack.c.l.b16 %v275
      %v467 = vunpack.c.l.b16 %v276
      %v468 = vunpack.c.l.b16 %v277
      %v469 = vunpack.c.l.b16 %v278
      %v470 = vunpack.c.l.b16 %v279
      %v471 = vunpack.c.l.b16 %v280
      %v472 = vpack.c.b16 %v453, %v452
      %v473 = vpack.c.b16 %v455, %v454
      %v474 = vpack.c.b16 %v457, %v456
      %v475 = vpack.c.b16 %v459, %v458
      %v476 = vpack.c.b16 %v461, %v460
      %v477 = vpack.c.b16 %v463, %v462
      %v478 = vpack.c.b16 %v465, %v464
      %v479 = vpack.c.b16 %v467, %v466
      %v480 = vpack.c.b16 %v469, %v468
      %v481 = vpack.c.b16 %v471, %v470
      %vm492 = vcmask 261120
      %v494 = vsel %vm492, %v385, 0
      %v497 = vsel %vm492, %v387, 0
      %v500 = vsel %vm492, %v389, 0
      %v503 = vsel %vm492, %v391, 0
      %v506 = vsel %vm492, %v393, 0
      %v509 = vsel %vm492, %v395, 0
      %v512 = vsel %vm492, %v397, 0
      %v515 = vsel %vm492, %v399, 0
      %v518 = vsel %vm492, %v401, 0
      %v521 = vsel %vm492, %v403, 0
      %v524 = vsel %vm492, %v405, 0
      %v527 = vsel %vm492, %v407, 0
      %v530 = vsel %vm492, %v409, 0
      %v533 = vsel %vm492, %v411, 0
      %v536 = vsel %vm492, %v413, 0
      %v539 = vsel %vm492, %v415, 0
      %541 = vmatprep.subr.bf16.mxu0 0
      %542 = vmatpush1.bf16.msra.mxu0 %v472
      %543 = vmatprep.subr.bf16.mxu0 0
      %544 = vmatpush1.bf16.msra.mxu0 %v473
      %545 = vmatprep.subr.bf16.mxu0 0
      %546 = vmatpush1.bf16.msra.mxu0 %v474
      %547 = vmatprep.subr.bf16.mxu0 0
      %548 = vmatpush1.bf16.msra.mxu0 %v475
      %549 = vmatprep.subr.bf16.mxu0 0
      %550 = vmatpush1.bf16.msra.mxu0 %v476
      %551 = vmatprep.subr.bf16.mxu0 0
      %552 = vmatpush1.bf16.msra.mxu0 %v477
      %553 = vmatprep.subr.bf16.mxu0 0
      %554 = vmatpush1.bf16.msra.mxu0 %v478
      %555 = vmatprep.subr.bf16.mxu0 0
      %556 = vmatpush1.bf16.msra.mxu0 %v479
      %557 = vmatprep.subr.bf16.mxu0 0
      %558 = vmatpush1.bf16.msra.mxu0 %v480
      %559 = vmatprep.subr.bf16.mxu0 0
      %560 = vmatpush1.bf16.msra.mxu0 %v481
      %561 = vmatprep.subr.bf16.mxu0 0
      %562 = vmatpush1.bf16.msra.mxu0 0
      %563 = vmatprep.subr.bf16.mxu0 0
      %564 = vmatpush1.bf16.msra.mxu0 0
      %565 = vmatprep.subr.bf16.mxu0 0
      %566 = vmatpush1.bf16.msra.mxu0 0
      %567 = vmatprep.subr.bf16.mxu0 0
      %568 = vmatpush1.bf16.msra.mxu0 0
      %569 = vmatprep.subr.bf16.mxu0 0
      %570 = vmatpush1.bf16.msra.mxu0 0
      %571 = vmatprep.subr.bf16.mxu0 0
      %572 = vmatpush1.bf16.msra.mxu0 0
      %573 = vmatprep.mubr.bf16.mxu0 %v494
      %574 = vmatmul.mubr.bf16.gmra.mrb[0].mxu0 %v384
      %v575 = vpop.f32.mrb[0].mxu0
      %v576 = vadd.f32 %v286, %v575
      %v577 = vpop.f32.mrb[0].mxu0
      %v578 = vpop.f32.mrb[0].mxu0
      %v579 = vadd.f32 %v286, %v578
      %v580 = vpop.f32.mrb[0].mxu0
      %581 = vmatprep.mubr.bf16.mxu0 %v497
      %582 = vmatmul.mubr.bf16.gmra.mrb[0].mxu0 %v386
      %v583 = vpop.f32.mrb[0].mxu0
      %v584 = vadd.f32 %v286, %v583
      %v585 = vpop.f32.mrb[0].mxu0
      %v586 = vpop.f32.mrb[0].mxu0
      %v587 = vadd.f32 %v286, %v586
      %v588 = vpop.f32.mrb[0].mxu0
      %589 = vmatprep.mubr.bf16.mxu0 %v500
      %590 = vmatmul.mubr.bf16.gmra.mrb[0].mxu0 %v388
      %v591 = vpop.f32.mrb[0].mxu0
      %v592 = vadd.f32 %v286, %v591
      %v593 = vpop.f32.mrb[0].mxu0
      %v594 = vpop.f32.mrb[0].mxu0
      %v595 = vadd.f32 %v286, %v594
      %v596 = vpop.f32.mrb[0].mxu0
      %597 = vmatprep.mubr.bf16.mxu0 %v503
      %598 = vmatmul.mubr.bf16.gmra.mrb[0].mxu0 %v390
      %v599 = vpop.f32.mrb[0].mxu0
      %v600 = vadd.f32 %v286, %v599
      %v601 = vpop.f32.mrb[0].mxu0
      %v602 = vpop.f32.mrb[0].mxu0
      %v603 = vadd.f32 %v286, %v602
      %v604 = vpop.f32.mrb[0].mxu0
      %605 = vmatprep.mubr.bf16.mxu0 %v506
      %606 = vmatmul.mubr.bf16.gmra.mrb[0].mxu0 %v392
      %v607 = vpop.f32.mrb[0].mxu0
      %v608 = vadd.f32 %v286, %v607
      %v609 = vpop.f32.mrb[0].mxu0
      %v610 = vpop.f32.mrb[0].mxu0
      %v611 = vadd.f32 %v286, %v610
      %v612 = vpop.f32.mrb[0].mxu0
      %613 = vmatprep.mubr.bf16.mxu0 %v509
      %614 = vmatmul.mubr.bf16.gmra.mrb[0].mxu0 %v394
      %v615 = vpop.f32.mrb[0].mxu0
      %v616 = vadd.f32 %v286, %v615
      %v617 = vpop.f32.mrb[0].mxu0
      %v618 = vpop.f32.mrb[0].mxu0
      %v619 = vadd.f32 %v286, %v618
      %v620 = vpop.f32.mrb[0].mxu0
      %621 = vmatprep.mubr.bf16.mxu0 %v512
      %622 = vmatmul.mubr.bf16.gmra.mrb[0].mxu0 %v396
      %v623 = vpop.f32.mrb[0].mxu0
      %v624 = vadd.f32 %v286, %v623
      %v625 = vpop.f32.mrb[0].mxu0
      %v626 = vpop.f32.mrb[0].mxu0
      %v627 = vadd.f32 %v286, %v626
      %v628 = vpop.f32.mrb[0].mxu0
      %629 = vmatprep.mubr.bf16.mxu0 %v515
      %630 = vmatmul.mubr.bf16.gmra.mrb[0].mxu0 %v398
      %v631 = vpop.f32.mrb[0].mxu0
      %v632 = vadd.f32 %v286, %v631
      %v633 = vpop.f32.mrb[0].mxu0
      %v634 = vpop.f32.mrb[0].mxu0
      %v635 = vadd.f32 %v286, %v634
      %v636 = vpop.f32.mrb[0].mxu0
      %637 = vmatprep.mubr.bf16.mxu0 %v518
      %638 = vmatmul.mubr.bf16.gmra.mrb[0].mxu0 %v400
      %v639 = vpop.f32.mrb[0].mxu0
      %v640 = vadd.f32 %v286, %v639
      %v641 = vpop.f32.mrb[0].mxu0
      %v642 = vpop.f32.mrb[0].mxu0
      %v643 = vadd.f32 %v286, %v642
      %v644 = vpop.f32.mrb[0].mxu0
      %645 = vmatprep.mubr.bf16.mxu0 %v521
      %646 = vmatmul.mubr.bf16.gmra.mrb[0].mxu0 %v402
      %v647 = vpop.f32.mrb[0].mxu0
      %v648 = vadd.f32 %v286, %v647
      %v649 = vpop.f32.mrb[0].mxu0
      %v650 = vpop.f32.mrb[0].mxu0
      %v651 = vadd.f32 %v286, %v650
      %v652 = vpop.f32.mrb[0].mxu0
      %653 = vmatprep.mubr.bf16.mxu0 %v524
      %654 = vmatmul.mubr.bf16.gmra.mrb[0].mxu0 %v404
      %v655 = vpop.f32.mrb[0].mxu0
      %v656 = vadd.f32 %v286, %v655
      %v657 = vpop.f32.mrb[0].mxu0
      %v658 = vpop.f32.mrb[0].mxu0
      %v659 = vadd.f32 %v286, %v658
      %v660 = vpop.f32.mrb[0].mxu0
      %661 = vmatprep.mubr.bf16.mxu0 %v527
      %662 = vmatmul.mubr.bf16.gmra.mrb[0].mxu0 %v406
      %v663 = vpop.f32.mrb[0].mxu0
      %v664 = vadd.f32 %v286, %v663
      %v665 = vpop.f32.mrb[0].mxu0
      %v666 = vpop.f32.mrb[0].mxu0
      %v667 = vadd.f32 %v286, %v666
      %v668 = vpop.f32.mrb[0].mxu0
      %669 = vmatprep.mubr.bf16.mxu0 %v530
      %670 = vmatmul.mubr.bf16.gmra.mrb[0].mxu0 %v408
      %v671 = vpop.f32.mrb[0].mxu0
      %v672 = vadd.f32 %v286, %v671
      %v673 = vpop.f32.mrb[0].mxu0
      %v674 = vpop.f32.mrb[0].mxu0
      %v675 = vadd.f32 %v286, %v674
      %v676 = vpop.f32.mrb[0].mxu0
      %677 = vmatprep.mubr.bf16.mxu0 %v533
      %678 = vmatmul.mubr.bf16.gmra.mrb[0].mxu0 %v410
      %v679 = vpop.f32.mrb[0].mxu0
      %v680 = vadd.f32 %v286, %v679
      %v681 = vpop.f32.mrb[0].mxu0
      %v682 = vpop.f32.mrb[0].mxu0
      %v683 = vadd.f32 %v286, %v682
      %v684 = vpop.f32.mrb[0].mxu0
      %685 = vmatprep.mubr.bf16.mxu0 %v536
      %686 = vmatmul.mubr.bf16.gmra.mrb[0].mxu0 %v412
      %v687 = vpop.f32.mrb[0].mxu0
      %v688 = vadd.f32 %v286, %v687
      %v689 = vpop.f32.mrb[0].mxu0
      %v690 = vpop.f32.mrb[0].mxu0
      %v691 = vadd.f32 %v286, %v690
      %v692 = vpop.f32.mrb[0].mxu0
      %693 = vmatprep.mubr.bf16.mxu0 %v539
      %694 = vmatmul.mubr.bf16.gmra.mrb[0].mxu0 %v414
      %v695 = vpop.f32.mrb[0].mxu0
      %v696 = vadd.f32 %v286, %v695
      %v697 = vpop.f32.mrb[0].mxu0
      %v698 = vpop.f32.mrb[0].mxu0
      %v699 = vadd.f32 %v286, %v698
      %v700 = vpop.f32.mrb[0].mxu0
      %701 = vdwg.mxu0
      %v702 = vmax.f32 %v576, 0.0
      %v703 = vmax.f32 %v579, 0.0
      %v704 = vmax.f32 %v584, 0.0
      %v705 = vmax.f32 %v587, 0.0
      %v706 = vmax.f32 %v592, 0.0
      %v707 = vmax.f32 %v595, 0.0
      %v708 = vmax.f32 %v600, 0.0
      %v709 = vmax.f32 %v603, 0.0
      %v710 = vmax.f32 %v608, 0.0
      %v711 = vmax.f32 %v611, 0.0
      %v712 = vmax.f32 %v616, 0.0
      %v713 = vmax.f32 %v619, 0.0
      %v714 = vmax.f32 %v624, 0.0
      %v715 = vmax.f32 %v627, 0.0
      %v716 = vmax.f32 %v632, 0.0
      %v717 = vmax.f32 %v635, 0.0
      %v718 = vmax.f32 %v640, 0.0
      %v719 = vmax.f32 %v643, 0.0
      %v720 = vmax.f32 %v648, 0.0
      %v721 = vmax.f32 %v651, 0.0
      %v722 = vmax.f32 %v656, 0.0
      %v723 = vmax.f32 %v659, 0.0
      %v724 = vmax.f32 %v664, 0.0
      %v725 = vmax.f32 %v667, 0.0
      %v726 = vmax.f32 %v672, 0.0
      %v727 = vmax.f32 %v675, 0.0
      %v728 = vmax.f32 %v680, 0.0
      %v729 = vmax.f32 %v683, 0.0
      %v730 = vmax.f32 %v688, 0.0
      %v731 = vmax.f32 %v691, 0.0
      %v732 = vmax.f32 %v696, 0.0
      %v733 = vmax.f32 %v699, 0.0
      %v734 = vpack.c.bf16 %v703, %v702
      %v735 = vpack.c.bf16 %v705, %v704
      %v736 = vpack.c.bf16 %v707, %v706
      %v737 = vpack.c.bf16 %v709, %v708
      %v738 = vpack.c.bf16 %v711, %v710
      %v739 = vpack.c.bf16 %v713, %v712
      %v740 = vpack.c.bf16 %v715, %v714
      %v741 = vpack.c.bf16 %v717, %v716
      %v742 = vpack.c.bf16 %v719, %v718
      %v743 = vpack.c.bf16 %v721, %v720
      %v744 = vpack.c.bf16 %v723, %v722
      %v745 = vpack.c.bf16 %v725, %v724
      %v746 = vpack.c.bf16 %v727, %v726
      %v747 = vpack.c.bf16 %v729, %v728
      %v748 = vpack.c.bf16 %v731, %v730
      %v749 = vpack.c.bf16 %v733, %v732
      %v766 = vunpack.c.l.b16 %v734
      %v767 = vunpack.c.h.b16 %v734
      %v768 = vunpack.c.l.b16 %v735
      %v769 = vunpack.c.h.b16 %v735
      %v770 = vunpack.c.l.b16 %v736
      %v771 = vunpack.c.h.b16 %v736
      %v772 = vunpack.c.l.b16 %v737
      %v773 = vunpack.c.h.b16 %v737
      %v774 = vunpack.c.l.b16 %v738
      %v775 = vunpack.c.h.b16 %v738
      %v776 = vunpack.c.l.b16 %v739
      %v777 = vunpack.c.h.b16 %v739
      %v778 = vunpack.c.l.b16 %v740
      %v779 = vunpack.c.h.b16 %v740
      %v780 = vunpack.c.l.b16 %v741
      %v781 = vunpack.c.h.b16 %v741
      %v782 = vunpack.c.l.b16 %v742
      %v783 = vunpack.c.h.b16 %v742
      %v784 = vunpack.c.l.b16 %v743
      %v785 = vunpack.c.h.b16 %v743
      %v786 = vunpack.c.l.b16 %v744
      %v787 = vunpack.c.h.b16 %v744
      %v788 = vunpack.c.l.b16 %v745
      %v789 = vunpack.c.h.b16 %v745
      %v790 = vunpack.c.l.b16 %v746
      %v791 = vunpack.c.h.b16 %v746
      %v792 = vunpack.c.l.b16 %v747
      %v793 = vunpack.c.h.b16 %v747
      %v794 = vunpack.c.l.b16 %v748
      %v795 = vunpack.c.h.b16 %v748
      %v796 = vunpack.c.l.b16 %v749
      %v797 = vunpack.c.h.b16 %v749
      %v798 = vpack.c.b16 %v766, %v766
      %v799 = vpack.c.b16 %v767, %v767
      %v800 = vpack.c.b16 %v768, %v768
      %v801 = vpack.c.b16 %v769, %v769
      %v802 = vpack.c.b16 %v770, %v770
      %v803 = vpack.c.b16 %v771, %v771
      %v804 = vpack.c.b16 %v772, %v772
      %v805 = vpack.c.b16 %v773, %v773
      %v806 = vpack.c.b16 %v774, %v774
      %v807 = vpack.c.b16 %v775, %v775
      %v808 = vpack.c.b16 %v776, %v776
      %v809 = vpack.c.b16 %v777, %v777
      %v810 = vpack.c.b16 %v778, %v778
      %v811 = vpack.c.b16 %v779, %v779
      %v812 = vpack.c.b16 %v780, %v780
      %v813 = vpack.c.b16 %v781, %v781
      %v814 = vpack.c.b16 %v782, %v782
      %v815 = vpack.c.b16 %v783, %v783
      %v816 = vpack.c.b16 %v784, %v784
      %v817 = vpack.c.b16 %v785, %v785
      %v818 = vpack.c.b16 %v786, %v786
      %v819 = vpack.c.b16 %v787, %v787
      %v820 = vpack.c.b16 %v788, %v788
      %v821 = vpack.c.b16 %v789, %v789
      %v822 = vpack.c.b16 %v790, %v790
      %v823 = vpack.c.b16 %v791, %v791
      %v824 = vpack.c.b16 %v792, %v792
      %v825 = vpack.c.b16 %v793, %v793
      %v826 = vpack.c.b16 %v794, %v794
      %v827 = vpack.c.b16 %v795, %v795
      %v828 = vpack.c.b16 %v796, %v796
      %v829 = vpack.c.b16 %v797, %v797
      %vm862 = vcmask 519168
      %863 = vst.msk [vmem:[%s226] sm:$0xf] %vm862, %v798
      %864 = vst.msk [vmem:[%s226 + $0x4] sm:$0xf] %vm862, %v799
      %865 = vst.msk [vmem:[%s226 + $0x8] sm:$0xf] %vm862, %v800
      %866 = vst.msk [vmem:[%s226 + $0xc] sm:$0xf] %vm862, %v801
      %867 = vst.msk [vmem:[%s226 + $0x10] sm:$0xf] %vm862, %v802
      %868 = vst.msk [vmem:[%s226 + $0x14] sm:$0xf] %vm862, %v803
      %869 = vst.msk [vmem:[%s226 + $0x18] sm:$0xf] %vm862, %v804
      %870 = vst.msk [vmem:[%s226 + $0x1c] sm:$0xf] %vm862, %v805
      %871 = vst.msk [vmem:[%s226 + $0x20] sm:$0xf] %vm862, %v806
      %872 = vst.msk [vmem:[%s226 + $0x24] sm:$0xf] %vm862, %v807
      %873 = vst.msk [vmem:[%s226 + $0x28] sm:$0xf] %vm862, %v808
      %874 = vst.msk [vmem:[%s226 + $0x2c] sm:$0xf] %vm862, %v809
      %875 = vst.msk [vmem:[%s226 + $0x30] sm:$0xf] %vm862, %v810
      %876 = vst.msk [vmem:[%s226 + $0x34] sm:$0xf] %vm862, %v811
      %877 = vst.msk [vmem:[%s226 + $0x38] sm:$0xf] %vm862, %v812
      %878 = vst.msk [vmem:[%s226 + $0x3c] sm:$0xf] %vm862, %v813
      %879 = vst.msk [vmem:[%s226 + $0x40] sm:$0xf] %vm862, %v814
      %880 = vst.msk [vmem:[%s226 + $0x44] sm:$0xf] %vm862, %v815
      %881 = vst.msk [vmem:[%s226 + $0x48] sm:$0xf] %vm862, %v816
      %882 = vst.msk [vmem:[%s226 + $0x4c] sm:$0xf] %vm862, %v817
      %883 = vst.msk [vmem:[%s226 + $0x50] sm:$0xf] %vm862, %v818
      %884 = vst.msk [vmem:[%s226 + $0x54] sm:$0xf] %vm862, %v819
      %885 = vst.msk [vmem:[%s226 + $0x58] sm:$0xf] %vm862, %v820
      %886 = vst.msk [vmem:[%s226 + $0x5c] sm:$0xf] %vm862, %v821
      %887 = vst.msk [vmem:[%s226 + $0x60] sm:$0xf] %vm862, %v822
      %888 = vst.msk [vmem:[%s226 + $0x64] sm:$0xf] %vm862, %v823
      %889 = vst.msk [vmem:[%s226 + $0x68] sm:$0xf] %vm862, %v824
      %890 = vst.msk [vmem:[%s226 + $0x6c] sm:$0xf] %vm862, %v825
      %891 = vst.msk [vmem:[%s226 + $0x70] sm:$0xf] %vm862, %v826
      %892 = vst.msk [vmem:[%s226 + $0x74] sm:$0xf] %vm862, %v827
      %893 = vst.msk [vmem:[%s226 + $0x78] sm:$0xf] %vm862, %v828
      %894 = vst.msk [vmem:[%s226 + $0x7c] sm:$0xf] %vm862, %v829
      %s895 = smul.u32 32, %s19
      %p896 = scmp.lt.s32.totalorder %s895, 63
      %s897 = scalar_select %p896, %s895, 63
      %p898 = scmp.lt.s32.totalorder %s18, 0
      %s899 = scalar_select %p898, %s18, 0
      %s900 = sadd.s32 %s899, %s897
      %s901 = smul.addr %s900, 4
      %s902 = scalar_lea.vmem %s3, %s901
      // Predicated region
      $region33: #{tpu_custom_call.1} parent=31 // pred_check
        %p903 = pneg %p124
      $region34: #{tpu_custom_call.1} parent=31 // pred_check_branch
        %905 = sbr.rel (%p903) target = $region36
      $region35: #{tpu_custom_call.1} parent=31 // pred_region
        %s906 = smul.u32 32, %s19
      $region36: #{tpu_custom_call.1} parent=31 // pred_fallthru
        _
    $region32: #{tpu_custom_call.1} parent=5 // pred_fallthru
      _
    %p907 = scmp.le.s32.totalorder 2, %s9
    // Predicated region
    $region37: #{tpu_custom_call.1} parent=5 // pred_check
      %p908 = pneg %p907
    $region38: #{tpu_custom_call.1} parent=5 // pred_check_branch
      %910 = sbr.rel (%p908) target = $region40
    $region39: #{tpu_custom_call.1} parent=5 // pred_region
      %s911 = ssub.s32 %s9, 2
      // Predicated region
      $region41: #{tpu_custom_call.1} parent=39 // pred_check
        %p912 = pneg %p130
      $region42: #{tpu_custom_call.1} parent=39 // pred_check_branch
        %914 = sbr.rel (%p912) target = $region44
      $region43: #{tpu_custom_call.1} parent=39 // pred_region
        %s915 = smul.u32 32, %s21
        %p916 = scmp.lt.s32.totalorder %s915, 63
        %s917 = scalar_select %p916, %s915, 63
        %p918 = scmp.lt.s32.totalorder %s20, 0
        %s919 = scalar_select %p918, %s20, 0
        %s920 = sadd.s32 %s919, %s917
        %s921 = smul.addr %s920, 4
        %s922 = scalar_lea.vmem %s3, %s921
      $region44: #{tpu_custom_call.1} parent=39 // pred_fallthru
        _
    $region40: #{tpu_custom_call.1} parent=5 // pred_fallthru
      _
  $region6: #{tpu_custom_call.1} parent=0 // loop_footer
    %s13 = sadd.s32 1, %s9
  $region7: #{tpu_custom_call.1} parent=0 // loop_footer_branch
    %8 = sbr.rel target = $region3
  $region8: #{tpu_custom_call.1} parent=0 // loop_exit
    _

</llo_original>
